<compile_context>
chip_gen: v7x
topology: tpu7x:2x2x1
jax: 0.10.0
libtpu: 0.0.40
codegen_flags: <defaults>
</compile_context>

<pallas_src>
import functools

import jax
import jax.numpy as jnp
from jax.experimental import pallas as pl
from jax.experimental.pallas import tpu as pltpu

EPS = 1e-6                    # matches DiceLoss(epsilon=1e-06)
LANES = 128
DEFAULT_TILE_ROWS = 4096      # (4096,128) f32 block = 2 MiB; 2 inputs x 2 bufs = 8 MiB VMEM
TWO_CORE_TILE_ROWS = 8192     # bigger blocks on 2-TC / high-HBM-BW chips


def _round_up(a, b):
    return ((a + b - 1) // b) * b


def _sublane_mult(dtype):
    # Minimum sublane granularity: 8 for 4-byte, 16 for 2-byte, 32 for 1-byte dtypes.
    return max(8, 32 // jnp.dtype(dtype).itemsize)


def _detect_tpu():
    """Return (tensorcores_per_device, suggested tile_rows) with a safe fallback."""
    num_cores, tile_rows = 1, DEFAULT_TILE_ROWS
    try:
        kind = jax.devices()[0].device_kind.lower()
        if ("v4" in kind) or ("v5p" in kind) or ("7" in kind):
            num_cores, tile_rows = 2, TWO_CORE_TILE_ROWS
    except Exception:
        pass
    return num_cores, tile_rows


def _dice_kernel(x_ref, t_ref, inter_ref, union_ref, *,
                 tile_rows, tiles_per_core, rows, needs_mask):
    c = pl.program_id(0)   # parallel (TensorCore) axis
    i = pl.program_id(1)   # arbitrary (streaming/reduction) axis

    @pl.when(i == 0)
    def _():
        inter_ref[...] = jnp.zeros_like(inter_ref)
        union_ref[...] = jnp.zeros_like(union_ref)

    x = x_ref[...].astype(jnp.float32)   # (tile_rows, 128)
    t = t_ref[...].astype(jnp.float32)

    if needs_mask:
        # Rows past the valid range (ragged tail block and any fully-out-of-range
        # clamped duplicate tile) must contribute exactly 0 to both sums.
        g = c * tiles_per_core + i
        valid = rows - g * tile_rows
        row_ids = jax.lax.broadcasted_iota(jnp.int32, (tile_rows, LANES), 0)
        keep = row_ids < valid
        x = jnp.where(keep, x, 0.0)
        t = jnp.where(keep, t, 0.0)

    # Reduce the tile to an (8,128) sublane/lane partial with pure VPU adds;
    # the (r,8,128) reshape is layout-free.  The single cross-lane reduce and
    # the dice formula happen once, in the wrapper.
    xr = x.reshape(tile_rows // 8, 8, LANES)
    tr = t.reshape(tile_rows // 8, 8, LANES)
    inter_ref[...] += jnp.sum(xr * tr, axis=0)[None]
    union_ref[...] += jnp.sum(xr + tr, axis=0)[None]


def dice_loss(inputs, targets, *, epsilon=EPS, tile_rows=None, num_cores=None):
    """inputs, targets: arrays of identical shape (any rank, any float dtype).
    Returns the scalar f32 dice loss (same math as PyTorch DiceLoss.forward)."""
    x = inputs.reshape(-1)
    t = targets.reshape(-1)
    m = x.shape[0]

    det_cores, det_rows = _detect_tpu()
    if num_cores is None:
        num_cores = det_cores
    if tile_rows is None:
        tile_rows = det_rows

    # Lane-dense layout: pad only to the next multiple of 128 (needed for the
    # reshape, and only when m % 128 != 0).  Zero padding is exact for all sums.
    m_pad = _round_up(max(m, 1), LANES)
    if m_pad != m:
        x = jnp.pad(x, (0, m_pad - m))
        t = jnp.pad(t, (0, m_pad - m))
    rows = m_pad // LANES
    x2 = x.reshape(rows, LANES)
    t2 = t.reshape(rows, LANES)

    sub = max(_sublane_mult(x2.dtype), _sublane_mult(t2.dtype))
    tile_rows = _round_up(min(tile_rows, _round_up(rows, sub)), sub)

    n_tiles = -(-rows // tile_rows)
    num_cores = max(1, min(num_cores, n_tiles))
    tiles_per_core = -(-n_tiles // num_cores)
    needs_mask = (rows % tile_rows != 0) or (tiles_per_core * num_cores != n_tiles)

    def in_index_map(c, i):
        g = c * tiles_per_core + i
        # Clamp so the DMA never targets a block fully past the array; any
        # duplicated tile is zeroed out by the in-kernel mask.
        return (jnp.minimum(g, n_tiles - 1), 0)

    out_index_map = lambda c, i: (c, 0, 0)

    kernel = functools.partial(
        _dice_kernel, tile_rows=tile_rows, tiles_per_core=tiles_per_core,
        rows=rows, needs_mask=needs_mask)

    inter_p, union_p = pl.pallas_call(
        kernel,
        out_shape=(
            jax.ShapeDtypeStruct((num_cores, 8, LANES), jnp.float32),
            jax.ShapeDtypeStruct((num_cores, 8, LANES), jnp.float32),
        ),
        grid_spec=pltpu.PrefetchScalarGridSpec(
            num_scalar_prefetch=0,
            grid=(num_cores, tiles_per_core),
            in_specs=[
                pl.BlockSpec((tile_rows, LANES), in_index_map),
                pl.BlockSpec((tile_rows, LANES), in_index_map),
            ],
            out_specs=[
                pl.BlockSpec((1, 8, LANES), out_index_map),
                pl.BlockSpec((1, 8, LANES), out_index_map),
            ],
        ),
        compiler_params=pltpu.CompilerParams(
            dimension_semantics=("parallel", "arbitrary"),
            vmem_limit_bytes=32 * 1024 * 1024,
        ),
    )(x2, t2)

    intersection = jnp.sum(inter_p)
    union = jnp.sum(union_p)
    return (1.0 - (2.0 * intersection + epsilon) / (union + epsilon)).astype(jnp.float32)


def _ref_dice(inputs, targets, epsilon=EPS):
    xf = inputs.reshape(-1).astype(jnp.float32)
    tf = targets.reshape(-1).astype(jnp.float32)
    intersection = jnp.sum(xf * tf)
    union = jnp.sum(xf) + jnp.sum(tf)
    return 1.0 - (2.0 * intersection + epsilon) / (union + epsilon)


if __name__ == "__main__":
    key = jax.random.PRNGKey(0)
    k1, k2, k3, k4 = jax.random.split(key, 4)

    # Small, module-consistent shape: batch=2, channels=4, spatial=16x16.
    B, C, H, W = 2, 4, 16, 16
    inputs = jax.nn.sigmoid(jax.random.normal(k1, (B, C, H, W), dtype=jnp.float32))
    targets = (jax.random.uniform(k2, (B, C, H, W)) > 0.5).astype(jnp.float32)

    loss = dice_loss(inputs, targets)
    jax.block_until_ready(loss)
    assert jnp.allclose(loss, _ref_dice(inputs, targets), rtol=1e-5, atol=1e-6), loss

    # Ragged case: exercises the 128-lane pad, in-kernel row masking, and the
    # 2-way core split with a clamped duplicate tile (also correct on 1-TC chips).
    shp = (3, 5, 7, 11)   # 1155 elements, not a multiple of 128
    xin = jax.nn.sigmoid(jax.random.normal(k3, shp, dtype=jnp.float32))
    tgt = (jax.random.uniform(k4, shp) > 0.5).astype(jnp.float32)
    loss2 = dice_loss(xin, tgt, tile_rows=8, num_cores=2)
    jax.block_until_ready(loss2)
    assert jnp.allclose(loss2, _ref_dice(xin, tgt), rtol=1e-5, atol=1e-6), loss2

    print("KERNEL_OK")
</pallas_src>

<mosaic_0001>
module attributes {stable_mosaic.version = 11 : i64} {
  func.func @_dice_kernel(%arg0: i32, %arg1: i32, %arg2: memref<16x128xf32, #tpu.memory_space<vmem>>, %arg3: memref<16x128xf32, #tpu.memory_space<vmem>>, %arg4: memref<1x8x128xf32, #tpu.memory_space<vmem>>, %arg5: memref<1x8x128xf32, #tpu.memory_space<vmem>>) attributes {dimension_semantics = [#tpu.dimension_semantics<parallel>, #tpu.dimension_semantics<arbitrary>], iteration_bounds = array<i64: 1, 1>, scalar_prefetch = 0 : i64, scratch_operands = 0 : i64, tpu.core_type = #tpu.core_type<tc>, window_params = [{transform_indices = @transform_0, window_bounds = array<i64: 16, 128>}, {transform_indices = @transform_1, window_bounds = array<i64: 16, 128>}, {transform_indices = @transform_2, window_bounds = array<i64: 1, 8, 128>}, {transform_indices = @transform_3, window_bounds = array<i64: 1, 8, 128>}]} {
    %c0_i32 = arith.constant 0 : i32
    %0 = arith.cmpi eq, %arg1, %c0_i32 : i32
    %1 = arith.extui %0 : i1 to i32
    %c0_i32_0 = arith.constant 0 : i32
    %2 = arith.cmpi ne, %1, %c0_i32_0 : i32
    scf.if %2 {
      %cst_17 = arith.constant 0.000000e+00 : f32
      %19 = vector.broadcast %cst_17 : f32 to vector<1x8x128xf32>
      %c0_18 = arith.constant 0 : index
      %c0_19 = arith.constant 0 : index
      %c0_20 = arith.constant 0 : index
      %20 = vector.load %arg4[%c0_18, %c0_19, %c0_20] : memref<1x8x128xf32, #tpu.memory_space<vmem>>, vector<1x8x128xf32>
      tpu.vector_store %arg4[%c0_18, %c0_19, %c0_20], %19 {strides = array<i32>} : memref<1x8x128xf32, #tpu.memory_space<vmem>>, vector<1x8x128xf32>,
      %cst_21 = arith.constant 0.000000e+00 : f32
      %21 = vector.broadcast %cst_21 : f32 to vector<1x8x128xf32>
      %c0_22 = arith.constant 0 : index
      %c0_23 = arith.constant 0 : index
      %c0_24 = arith.constant 0 : index
      %22 = vector.load %arg5[%c0_22, %c0_23, %c0_24] : memref<1x8x128xf32, #tpu.memory_space<vmem>>, vector<1x8x128xf32>
      tpu.vector_store %arg5[%c0_22, %c0_23, %c0_24], %21 {strides = array<i32>} : memref<1x8x128xf32, #tpu.memory_space<vmem>>, vector<1x8x128xf32>,
    } else {
    }
    %c0 = arith.constant 0 : index
    %c0_1 = arith.constant 0 : index
    %3 = vector.load %arg2[%c0, %c0_1] : memref<16x128xf32, #tpu.memory_space<vmem>>, vector<16x128xf32>
    %c0_2 = arith.constant 0 : index
    %c0_3 = arith.constant 0 : index
    %4 = vector.load %arg3[%c0_2, %c0_3] : memref<16x128xf32, #tpu.memory_space<vmem>>, vector<16x128xf32>
    %5 = vector.shape_cast %3 : vector<16x128xf32> to vector<2x8x128xf32>
    %6 = vector.shape_cast %4 : vector<16x128xf32> to vector<2x8x128xf32>
    %c0_4 = arith.constant 0 : index
    %c0_5 = arith.constant 0 : index
    %c0_6 = arith.constant 0 : index
    %7 = vector.load %arg4[%c0_4, %c0_5, %c0_6] : memref<1x8x128xf32, #tpu.memory_space<vmem>>, vector<1x8x128xf32>
    %8 = arith.mulf %5, %6 : vector<2x8x128xf32>
    %cst = arith.constant dense<0.000000e+00> : vector<8x128xf32>
    %9 = vector.multi_reduction <add>, %8, %cst [0] : vector<2x8x128xf32> to vector<8x128xf32>
    %10 = vector.shape_cast %9 : vector<8x128xf32> to vector<1x8x128xf32>
    %11 = arith.addf %7, %10 : vector<1x8x128xf32>
    %c0_7 = arith.constant 0 : index
    %c0_8 = arith.constant 0 : index
    %c0_9 = arith.constant 0 : index
    %12 = vector.load %arg4[%c0_7, %c0_8, %c0_9] : memref<1x8x128xf32, #tpu.memory_space<vmem>>, vector<1x8x128xf32>
    tpu.vector_store %arg4[%c0_7, %c0_8, %c0_9], %11 {strides = array<i32>} : memref<1x8x128xf32, #tpu.memory_space<vmem>>, vector<1x8x128xf32>,
    %c0_10 = arith.constant 0 : index
    %c0_11 = arith.constant 0 : index
    %c0_12 = arith.constant 0 : index
    %13 = vector.load %arg5[%c0_10, %c0_11, %c0_12] : memref<1x8x128xf32, #tpu.memory_space<vmem>>, vector<1x8x128xf32>
    %14 = arith.addf %5, %6 : vector<2x8x128xf32>
    %cst_13 = arith.constant dense<0.000000e+00> : vector<8x128xf32>
    %15 = vector.multi_reduction <add>, %14, %cst_13 [0] : vector<2x8x128xf32> to vector<8x128xf32>
    %16 = vector.shape_cast %15 : vector<8x128xf32> to vector<1x8x128xf32>
    %17 = arith.addf %13, %16 : vector<1x8x128xf32>
    %c0_14 = arith.constant 0 : index
    %c0_15 = arith.constant 0 : index
    %c0_16 = arith.constant 0 : index
    %18 = vector.load %arg5[%c0_14, %c0_15, %c0_16] : memref<1x8x128xf32, #tpu.memory_space<vmem>>, vector<1x8x128xf32>
    tpu.vector_store %arg5[%c0_14, %c0_15, %c0_16], %17 {strides = array<i32>} : memref<1x8x128xf32, #tpu.memory_space<vmem>>, vector<1x8x128xf32>,
    return
  }
  func.func @transform_0(%arg0: i32, %arg1: i32) -> (i32, i32) {
    %c1_i32 = arith.constant 1 : i32
    %0 = arith.muli %arg0, %c1_i32 : i32
    %1 = arith.addi %0, %arg1 : i32
    %c0_i32 = arith.constant 0 : i32
    %2 = arith.minsi %1, %c0_i32 : i32
    %c0_i32_0 = arith.constant 0 : i32
    %c0_i32_1 = arith.constant 0 : i32
    return %2, %c0_i32_0 : i32, i32
  }
  func.func @transform_1(%arg0: i32, %arg1: i32) -> (i32, i32) {
    %c1_i32 = arith.constant 1 : i32
    %0 = arith.muli %arg0, %c1_i32 : i32
    %1 = arith.addi %0, %arg1 : i32
    %c0_i32 = arith.constant 0 : i32
    %2 = arith.minsi %1, %c0_i32 : i32
    %c0_i32_0 = arith.constant 0 : i32
    %c0_i32_1 = arith.constant 0 : i32
    return %2, %c0_i32_0 : i32, i32
  }
  func.func @transform_2(%arg0: i32, %arg1: i32) -> (i32, i32, i32) {
    %c0_i32 = arith.constant 0 : i32
    %c0_i32_0 = arith.constant 0 : i32
    %c0_i32_1 = arith.constant 0 : i32
    return %arg0, %c0_i32, %c0_i32_0 : i32, i32, i32
  }
  func.func @transform_3(%arg0: i32, %arg1: i32) -> (i32, i32, i32) {
    %c0_i32 = arith.constant 0 : i32
    %c0_i32_0 = arith.constant 0 : i32
    %c0_i32_1 = arith.constant 0 : i32
    return %arg0, %c0_i32, %c0_i32_0 : i32, i32, i32
  }
}

</mosaic_0001>

<llo_original>
// kernel: tpu_custom_call.1
$region0: #{tpu_custom_call.1}
  #allocation0 [shape = 'u32[]', space=smem, size = 0x4, offset = 0x4, fixed_abs, tag = 'smem constant byte address 0x4 - core index']
  #allocation1 [shape = 'u32[144,128]{1,0:T(1,128)}', space=vmem, size = 0x12000, scoped, tag = 'internal scratch']
  %s0 = inlined_call_operand.hbm [shape: f32[16,128], index: 0, kind: input, shape index: {}]
  %s1 = inlined_call_operand.hbm [shape: f32[16,128], index: 1, kind: input, shape index: {}]
  %s2 = inlined_call_operand.hbm [shape: f32[1,8,128], index: 2, kind: output, shape index: {0}]
  %s3 = inlined_call_operand.hbm [shape: f32[1,8,128], index: 3, kind: output, shape index: {1}]
  %4 = xla_tuple %s2, %s3
  %s5 = sld [smem:[#allocation0]]
  $region38: #{tpu_custom_call.1} parent=0
    _
  %s7 = ssub.s32 1, %s5
  %s8 = scalar_select 0, %s7, %s5
  $region1: #{tpu_custom_call.1} parent=0
    #allocation2 [shape = 'u8[8192]{0}', space=vmem, size = 0x2000, scoped, tag = 'input window, operand 0, single buffered']
    #allocation3 [shape = 's32[1]{0}', space=sflag, size = 0x4, scoped, tag = 'scoped memory for tpu_custom_call.1']
    #allocation4 [shape = 's32[1]{0}', space=sflag, size = 0x4, scoped, tag = 'scoped memory for tpu_custom_call.1']
    #allocation5 [shape = 'u8[8192]{0}', space=vmem, size = 0x2000, scoped, tag = 'input window, operand 1, single buffered']
    #allocation6 [shape = 's32[1]{0}', space=sflag, size = 0x4, scoped, tag = 'scoped memory for tpu_custom_call.1']
    #allocation7 [shape = 'u8[4096]{0}', space=vmem, size = 0x1000, scoped, tag = 'output window, operand 0, single buffered']
    #allocation8 [shape = 'u8[4096]{0}', space=vmem, size = 0x1000, scoped, tag = 'output window, operand 1, single buffered']
    #allocation9 [shape = 's32[1]{0}', space=sflag, size = 0x4, scoped, tag = 'scoped memory for tpu_custom_call.1']
    %9 = vsyncpa [#allocation3], 0
    %10 = vsyncpa [#allocation6], 0
    %11 = vsyncpa [#allocation4], 0
    %12 = vsyncpa [#allocation9], 0
    // Predicated region
    $region2: #{tpu_custom_call.1} parent=1 // pred_check
      _
    $region3: #{tpu_custom_call.1} parent=1 // pred_check_branch
      %14 = sbr.rel (0) target = $region5
    $region4: #{tpu_custom_call.1} parent=1 // pred_region
      %s15 = sadd.s32 0, 0
      %p16 = scmp.lt.s32.totalorder %s15, 0
      %s17 = scalar_select %p16, %s15, 0
      %s18 = smul.u32 2, %s17
      %s20 = ssub.s32 256, 256
      %21 = vsyncadd [#allocation3], %s20
      %s22 = smul.addr %s18, 128
      %s23 = scalar_lea.hbm %s0, %s22
      %s24 = sshll.u32 [#allocation2], 4
      %s25 = int_to_ptr.vmem [resolvable:$true] %s24
      %30 = dma.hbm_to_vmem [thread:$0]  %s23, 256, %s25, [#allocation3], 128, 128, 8
    $region5: #{tpu_custom_call.1} parent=1 // pred_fallthru
      _
    // Predicated region
    $region6: #{tpu_custom_call.1} parent=1 // pred_check
      _
    $region7: #{tpu_custom_call.1} parent=1 // pred_check_branch
      %32 = sbr.rel (0) target = $region9
    $region8: #{tpu_custom_call.1} parent=1 // pred_region
      %s33 = sadd.s32 0, 0
      %p34 = scmp.lt.s32.totalorder %s33, 0
      %s35 = scalar_select %p34, %s33, 0
      %s36 = smul.u32 2, %s35
      %s38 = ssub.s32 256, 256
      %39 = vsyncadd [#allocation6], %s38
      %s40 = smul.addr %s36, 128
      %s41 = scalar_lea.hbm %s1, %s40
      %s42 = sshll.u32 [#allocation5], 4
      %s43 = int_to_ptr.vmem [resolvable:$true] %s42
      %48 = dma.hbm_to_vmem [thread:$0]  %s41, 256, %s43, [#allocation6], 128, 128, 8
    $region9: #{tpu_custom_call.1} parent=1 // pred_fallthru
      _
    // Predicated region
    $region10: #{tpu_custom_call.1} parent=1 // pred_check
      _
    $region11: #{tpu_custom_call.1} parent=1 // pred_check_branch
      %50 = sbr.rel (0) target = $region13
    $region12: #{tpu_custom_call.1} parent=1 // pred_region
      %51 = dma.done [#allocation3], 256
    $region13: #{tpu_custom_call.1} parent=1 // pred_fallthru
      _
    // Predicated region
    $region14: #{tpu_custom_call.1} parent=1 // pred_check
      _
    $region15: #{tpu_custom_call.1} parent=1 // pred_check_branch
      %53 = sbr.rel (0) target = $region17
    $region16: #{tpu_custom_call.1} parent=1 // pred_region
      %54 = dma.done [#allocation6], 256
    $region17: #{tpu_custom_call.1} parent=1 // pred_fallthru
      _
    %s55 = sadd.s32 0, 0
    %p56 = scmp.lt.s32.totalorder %s55, 0
    %s57 = scalar_select %p56, %s55, 0
    %s58 = smul.u32 2, %s57
    %s59 = sadd.s32 0, 0
    %p60 = scmp.lt.s32.totalorder %s59, 0
    %s61 = scalar_select %p60, %s59, 0
    %s62 = smul.u32 2, %s61
    %p63 = scmp.eq.s32.totalorder 0, 0
    // Predicated region
    $region18: #{tpu_custom_call.1} parent=1 // pred_check
      %p64 = pneg %p63
    $region19: #{tpu_custom_call.1} parent=1 // pred_check_branch
      %66 = sbr.rel (%p64) target = $region21
    $region20: #{tpu_custom_call.1} parent=1 // pred_region
      %67 = vst [vmem:[#allocation7] sm:$0xff] 0.0
      %68 = vst [vmem:[#allocation8] sm:$0xff] 0.0
    $region21: #{tpu_custom_call.1} parent=1 // pred_fallthru
      _
    %v69 = vld [vmem:[#allocation2] sm:$0xff]
    %v70 = vld [vmem:[#allocation2 + $0x8] sm:$0xff]
    %v71 = vld [vmem:[#allocation5] sm:$0xff]
    %v72 = vld [vmem:[#allocation5 + $0x8] sm:$0xff]
    %v73 = vld [vmem:[#allocation7] sm:$0xff]
    %v74 = vmul.f32 %v69, %v71
    %v75 = vmul.f32 %v70, %v72
    %v76 = vadd.f32 %v74, %v75
    %v77 = vadd.f32 %v73, %v76
    %78 = vst [vmem:[#allocation7] sm:$0xff] %v77
    %v79 = vld [vmem:[#allocation8] sm:$0xff]
    %v80 = vadd.f32 %v69, %v71
    %v81 = vadd.f32 %v70, %v72
    %v82 = vadd.f32 %v80, %v81
    %v83 = vadd.f32 %v79, %v82
    %84 = vst [vmem:[#allocation8] sm:$0xff] %v83
    // Predicated region
    $region22: #{tpu_custom_call.1} parent=1 // pred_check
      _
    $region23: #{tpu_custom_call.1} parent=1 // pred_check_branch
      %86 = sbr.rel (0) target = $region25
    $region24: #{tpu_custom_call.1} parent=1 // pred_region
      %s88 = ssub.s32 128, 128
      %89 = vsyncadd [#allocation4], %s88
      %s91 = sshll.u32 [#allocation7], 4
      %s92 = int_to_ptr.vmem [resolvable:$true] %s91
      %94 = dma.vmem_to_hbm [thread:$0]  %s92, 128, %s2, [#allocation4]
    $region25: #{tpu_custom_call.1} parent=1 // pred_fallthru
      _
    // Predicated region
    $region26: #{tpu_custom_call.1} parent=1 // pred_check
      _
    $region27: #{tpu_custom_call.1} parent=1 // pred_check_branch
      %96 = sbr.rel (0) target = $region29
    $region28: #{tpu_custom_call.1} parent=1 // pred_region
      %s98 = ssub.s32 128, 128
      %99 = vsyncadd [#allocation9], %s98
      %s101 = sshll.u32 [#allocation8], 4
      %s102 = int_to_ptr.vmem [resolvable:$true] %s101
      %104 = dma.vmem_to_hbm [thread:$0]  %s102, 128, %s3, [#allocation9]
    $region29: #{tpu_custom_call.1} parent=1 // pred_fallthru
      _
    // Predicated region
    $region30: #{tpu_custom_call.1} parent=1 // pred_check
      _
    $region31: #{tpu_custom_call.1} parent=1 // pred_check_branch
      %106 = sbr.rel (0) target = $region33
    $region32: #{tpu_custom_call.1} parent=1 // pred_region
      %107 = dma.done [#allocation4], 128
    $region33: #{tpu_custom_call.1} parent=1 // pred_fallthru
      _
    // Predicated region
    $region34: #{tpu_custom_call.1} parent=1 // pred_check
      _
    $region35: #{tpu_custom_call.1} parent=1 // pred_check_branch
      %109 = sbr.rel (0) target = $region37
    $region36: #{tpu_custom_call.1} parent=1 // pred_region
      %110 = dma.done [#allocation9], 128
    $region37: #{tpu_custom_call.1} parent=1 // pred_fallthru
      _
    %111 = vsyncpa [#allocation3], 1
    %112 = vsyncpa [#allocation6], 1
    %113 = vsyncpa [#allocation4], 1
    %114 = vsyncpa [#allocation9], 1

</llo_original>
